<compile_context>
chip_gen: v7x
topology: tpu7x:2x2x1
jax: 0.10.0
libtpu: 0.0.40
codegen_flags: <defaults>
</compile_context>

<pallas_src>
import functools

import jax
import jax.numpy as jnp
import numpy as np
from jax.experimental import pallas as pl
from jax.experimental.pallas import tpu as pltpu

HEAD = 1          # params['global_context']['head']
EPS = 1e-5        # self.epsilon


def _round_up(v, m):
    return ((v + m - 1) // m) * m


def _round_down(v, m):
    return (v // m) * m


def _vmem_capacity_bytes():
    try:
        return int(pltpu.get_tpu_info().vmem_capacity_bytes)
    except Exception:
        return 128 << 20  # v5e/v6e default


def _vmem_limit(block_bytes, vmem_cap, headroom=4 << 20):
    # double-buffered pipeline blocks + slack; never ask for more than 80% of
    # this generation's physical VMEM (v7x: 64 MiB per TensorCore).
    need = 2 * block_bytes + headroom
    cap = int(0.8 * vmem_cap)
    return int(min(max(need, 32 << 20), cap))


def _gap_sim_kernel(x_ref, gap_ref, sim_ref, *, inv_n, scale, accumulate,
                    c_total, tc, mask_rows):
    """Per (batch, C-tile): gap (tc,1) and raw-sim contribution (1,N).

    sim is a resident f32 accumulator across the C axis when accumulate=True.
    """
    x = x_ref[...]                                            # (tc, N)
    if mask_rows:
        # Tail C tile overhangs the array: zero the out-of-bounds rows so they
        # contribute nothing to gap or sim (their gap stores are masked).
        row = (jax.lax.broadcasted_iota(jnp.int32, x.shape, 0)
               + pl.program_id(1) * tc)
        x = jnp.where(row < c_total, x, jnp.zeros_like(x))
    gap = jnp.sum(x, axis=-1, keepdims=True,
                  dtype=jnp.float32) * inv_n                  # (tc, 1) f32
    gap_ref[...] = gap
    # sim += scale * gap^T @ x on the MXU; scale folded into the (1, tc) lhs.
    lhs = (gap * scale).astype(x.dtype).T                     # (1, tc)
    contrib = jnp.dot(lhs, x, preferred_element_type=jnp.float32)  # (1, N)
    if accumulate:
        @pl.when(pl.program_id(1) == 0)
        def _():
            sim_ref[...] = jnp.zeros_like(sim_ref)
        sim_ref[...] += contrib
    else:
        sim_ref[...] = contrib


def _bcast_mul_kernel(gc_ref, sim_ref, o_ref):
    """out[c, n] = gc[c] * sim[n]; lane-dense (C, TN) store."""
    o_ref[...] = (gc_ref[...] * sim_ref[...]).astype(o_ref.dtype)


def global_context(x, w1, b1, w2, b2, rw, rb):
    """x: (B, C, W, H) NCHW. Returns (B, C, W, H)."""
    B, C, W, H = x.shape
    N = W * H
    scale = float(C // HEAD) ** -0.5
    itemsize = x.dtype.itemsize
    vmem_cap = _vmem_capacity_bytes()

    x2 = x.reshape(B, C, N)                      # no padding: full-dim blocks

    # ---------------- pass 1: gap + raw sim (reads x exactly once) ----------------
    c8 = _round_up(C, 8)
    n128 = _round_up(N, 128)
    out1_bytes = c8 * 128 * 4 + 8 * n128 * 4          # gap + sim block estimates
    pass1_budget = int(0.65 * vmem_cap)
    if 2 * (c8 * n128 * itemsize + out1_bytes) <= pass1_budget:
        tc = C                                         # monolithic (C, N) block
    else:
        per_row = n128 * itemsize
        tc = _round_down(
            max(pass1_budget // 2 - out1_bytes, 8 * per_row) // per_row, 8)
        tc = max(8, min(tc, C))
    if tc >= C:
        tc, nct = C, 1
    else:
        nct = pl.cdiv(C, tc)
    mask_rows = (nct > 1) and (C % tc != 0)
    accumulate = nct > 1

    blk1 = (_round_up(tc, 8) * n128 * itemsize        # x tile
            + _round_up(tc, 8) * 128 * 4              # gap tile (lane-padded)
            + 8 * n128 * 4)                           # sim tile
    gap, sim_raw = pl.pallas_call(
        functools.partial(_gap_sim_kernel, inv_n=1.0 / N, scale=scale,
                          accumulate=accumulate, c_total=C, tc=tc,
                          mask_rows=mask_rows),
        out_shape=(jax.ShapeDtypeStruct((B, C, 1), jnp.float32),
                   jax.ShapeDtypeStruct((B, 1, N), jnp.float32)),
        grid=(B, nct),
        in_specs=[pl.BlockSpec((None, tc, N), lambda b, ci: (b, ci, 0))],
        out_specs=(pl.BlockSpec((None, tc, 1), lambda b, ci: (b, ci, 0)),
                   pl.BlockSpec((None, 1, N), lambda b, ci: (b, 0, 0))),
        compiler_params=pltpu.CompilerParams(
            dimension_semantics=("parallel", "arbitrary"),
            vmem_limit_bytes=_vmem_limit(blk1, vmem_cap)),
    )(x2)
    # TODO(synk): for B == 1 on v7x, add a parallel N split to pass 1 so both
    # TensorCores stream x (pass 2 already shards across B x N tiles).
    # TODO(synk): optionally emit sim mean / sum-of-squares from pass 1 so the
    # glue below does not re-read sim_raw from HBM (only matters for small C).

    # ------ tiny XLA glue: compete-MLP on gap + sim normalisation folding ------
    gap2 = gap[:, :, 0]                                       # (B, C) f32
    h1 = gap2 @ w1.T + b1                                     # fc1 -> (B, 2C)
    hmax = jnp.maximum(h1[:, :C], h1[:, C:])                  # compete max
    gc = (hmax @ w2.T + b2).astype(jnp.float32)               # fc2 -> (B, C)

    sim = sim_raw[:, 0, :]                                    # (B, N) f32
    mean = jnp.mean(sim, axis=-1, keepdims=True)
    # torch.std is unbiased (ddof=1); NaN when W*H == 1, matching torch.
    std = jnp.std(sim, axis=-1, keepdims=True, ddof=1)
    alpha = rw[0] / (std + EPS)                               # (B, 1)
    beta = rb[0] - mean * alpha                               # (B, 1)
    sim_norm = (alpha * sim + beta)[:, None, :]               # (B, 1, N) f32
    gc3 = gc[:, :, None]                                      # (B, C, 1) f32

    # ---------- pass 2: streaming broadcast write (writes out exactly once) ----------
    tn_budget = int(0.30 * vmem_cap)                 # double-buffered out tiles
    tn = _round_down(tn_budget // (2 * c8 * itemsize), 128)
    tn = max(128, min(tn, 4096))
    if tn >= N:
        tn = N                                       # single full-width block
    grid_n = pl.cdiv(N, tn)                          # tail block stores masked

    blk2 = (c8 * 128 * 4                             # gc (C,1), lane-padded
            + 8 * _round_up(tn, 128) * 4             # sim tile
            + c8 * _round_up(tn, 128) * itemsize)    # out tile
    out = pl.pallas_call(
        _bcast_mul_kernel,
        out_shape=jax.ShapeDtypeStruct((B, C, N), x.dtype),
        grid=(B, grid_n),
        in_specs=[pl.BlockSpec((None, C, 1), lambda b, t: (b, 0, 0)),
                  pl.BlockSpec((None, 1, tn), lambda b, t: (b, 0, t))],
        out_specs=pl.BlockSpec((None, C, tn), lambda b, t: (b, 0, t)),
        compiler_params=pltpu.CompilerParams(
            dimension_semantics=("parallel", "parallel"),
            vmem_limit_bytes=_vmem_limit(blk2, vmem_cap)),
    )(gc3, sim_norm)

    return out.reshape(B, C, W, H)


def ref_global_context(x, w1, b1, w2, b2, rw, rb):
    """Pure-JAX reference of the PyTorch forward (weight_gc + compete path)."""
    B, C, W, H = x.shape
    N = W * H
    xf = x.reshape(B, C, N)
    gap = xf.mean(axis=-1)                                     # (B, C)
    scale = float(C // HEAD) ** -0.5
    sim = jnp.einsum('bcn,bc->bn', xf, gap) * scale            # (B, N)
    mean = sim.mean(axis=-1, keepdims=True)
    std = jnp.std(sim, axis=-1, keepdims=True, ddof=1)
    sim = (sim - mean) / (std + EPS)
    sim = sim * rw[0] + rb[0]
    h1 = gap @ w1.T + b1                                       # (B, 2C)
    hmax = jnp.maximum(h1[:, :C], h1[:, C:])                   # (B, C)
    gc = hmax @ w2.T + b2                                      # (B, C)
    out = gc[:, :, None] * sim[:, None, :]
    return out.reshape(B, C, W, H)


if __name__ == "__main__":
    key = jax.random.PRNGKey(0)
    # shapes: aligned N; non-128-aligned N (7*7=49, no pad/slice round trip);
    # N > TN-cap (72*72=5184) to exercise the cdiv grid with a masked tail.
    for (B, C, W, H) in [(2, 4, 16, 16), (2, 8, 7, 7), (1, 8, 72, 72)]:
        key, kx, k1, k2, k3, k4, k5, k6 = jax.random.split(key, 8)
        x = jax.random.normal(kx, (B, C, W, H), dtype=jnp.float32)
        # fc1: Linear(dim, 2*dim); fc2: Linear(dim, dim) -- synthetic init
        w1 = jax.random.normal(k1, (2 * C, C), dtype=jnp.float32) * 0.1
        b1 = jax.random.normal(k2, (2 * C,), dtype=jnp.float32) * 0.1
        w2 = jax.random.normal(k3, (C, C), dtype=jnp.float32) * 0.1
        b2 = jax.random.normal(k4, (C,), dtype=jnp.float32) * 0.1
        # rescale_weight / rescale_bias (module inits ones/zeros; randomized
        # deterministically here to exercise the path)
        rw = 1.0 + 0.1 * jax.random.normal(k5, (HEAD,), dtype=jnp.float32)
        rb = 0.1 * jax.random.normal(k6, (HEAD,), dtype=jnp.float32)

        out = jax.block_until_ready(global_context(x, w1, b1, w2, b2, rw, rb))
        ref = ref_global_context(x, w1, b1, w2, b2, rw, rb)
        np.testing.assert_allclose(np.asarray(out), np.asarray(ref),
                                   rtol=2e-4, atol=2e-4)
    print("KERNEL_OK")
</pallas_src>

<mosaic_0001>
module attributes {stable_mosaic.version = 11 : i64} {
  func.func @_gap_sim_kernel(%arg0: i32, %arg1: i32, %arg2: memref<1x4x256xf32, #tpu.memory_space<vmem>>, %arg3: memref<1x4x1xf32, #tpu.memory_space<vmem>>, %arg4: memref<1x1x256xf32, #tpu.memory_space<vmem>>) attributes {dimension_semantics = [#tpu.dimension_semantics<parallel>, #tpu.dimension_semantics<arbitrary>], iteration_bounds = array<i64: 2, 1>, scalar_prefetch = 0 : i64, scratch_operands = 0 : i64, tpu.core_type = #tpu.core_type<tc>, window_params = [{transform_indices = @transform_0, window_bounds = array<i64: 1, 4, 256>}, {transform_indices = @transform_1, window_bounds = array<i64: 1, 4, 1>}, {transform_indices = @transform_2, window_bounds = array<i64: 1, 1, 256>}]} {
    %c0 = arith.constant 0 : index
    %c0_0 = arith.constant 0 : index
    %c0_1 = arith.constant 0 : index
    %0 = vector.load %arg2[%c0, %c0_0, %c0_1] : memref<1x4x256xf32, #tpu.memory_space<vmem>>, vector<1x4x256xf32>
    %1 = vector.shape_cast %0 : vector<1x4x256xf32> to vector<4x256xf32>
    %cst = arith.constant dense<0.000000e+00> : vector<4xf32>
    %2 = vector.multi_reduction <add>, %1, %cst [1] : vector<4x256xf32> to vector<4xf32>
    %3 = vector.shape_cast %2 : vector<4xf32> to vector<4x1xf32>
    %cst_2 = arith.constant 3.906250e-03 : f32
    %4 = vector.broadcast %cst_2 : f32 to vector<4x1xf32>
    %5 = arith.mulf %3, %4 : vector<4x1xf32>
    %c0_3 = arith.constant 0 : index
    %c0_4 = arith.constant 0 : index
    %c0_5 = arith.constant 0 : index
    %6 = vector.load %arg3[%c0_3, %c0_4, %c0_5] : memref<1x4x1xf32, #tpu.memory_space<vmem>>, vector<1x4x1xf32>
    %7 = vector.shape_cast %6 : vector<1x4x1xf32> to vector<4x1xf32>
    %8 = vector.shape_cast %5 : vector<4x1xf32> to vector<1x4x1xf32>
    tpu.vector_store %arg3[%c0_3, %c0_4, %c0_5], %8 {strides = array<i32>} : memref<1x4x1xf32, #tpu.memory_space<vmem>>, vector<1x4x1xf32>,
    %cst_6 = arith.constant 5.000000e-01 : f32
    %9 = vector.broadcast %cst_6 : f32 to vector<4x1xf32>
    %10 = arith.mulf %5, %9 : vector<4x1xf32>
    %11 = tpu.transpose %10, [1, 0] : vector<4x1xf32> -> vector<1x4xf32>
    %cst_7 = arith.constant dense<0.000000e+00> : vector<1x256xf32>
    %12 = tpu.matmul %11, %1, %cst_7 {dimension_numbers = #tpu.dot_dimension_numbers<[1], [0], [0], [1], [0, 0, 1, 1], [], []>} : vector<1x4xf32>, vector<4x256xf32>, vector<1x256xf32> -> vector<1x256xf32>
    %c0_8 = arith.constant 0 : index
    %c0_9 = arith.constant 0 : index
    %c0_10 = arith.constant 0 : index
    %13 = vector.load %arg4[%c0_8, %c0_9, %c0_10] : memref<1x1x256xf32, #tpu.memory_space<vmem>>, vector<1x1x256xf32>
    %14 = vector.shape_cast %13 : vector<1x1x256xf32> to vector<1x256xf32>
    %15 = vector.shape_cast %12 : vector<1x256xf32> to vector<1x1x256xf32>
    tpu.vector_store %arg4[%c0_8, %c0_9, %c0_10], %15 {strides = array<i32>} : memref<1x1x256xf32, #tpu.memory_space<vmem>>, vector<1x1x256xf32>,
    return
  }
  func.func @transform_0(%arg0: i32, %arg1: i32) -> (i32, i32, i32) {
    %c0_i32 = arith.constant 0 : i32
    %c0_i32_0 = arith.constant 0 : i32
    return %arg0, %arg1, %c0_i32 : i32, i32, i32
  }
  func.func @transform_1(%arg0: i32, %arg1: i32) -> (i32, i32, i32) {
    %c0_i32 = arith.constant 0 : i32
    %c0_i32_0 = arith.constant 0 : i32
    return %arg0, %arg1, %c0_i32 : i32, i32, i32
  }
  func.func @transform_2(%arg0: i32, %arg1: i32) -> (i32, i32, i32) {
    %c0_i32 = arith.constant 0 : i32
    %c0_i32_0 = arith.constant 0 : i32
    %c0_i32_1 = arith.constant 0 : i32
    return %arg0, %c0_i32, %c0_i32_0 : i32, i32, i32
  }
}

</mosaic_0001>

<llo_original>
// kernel: tpu_custom_call.1
$region0: #{tpu_custom_call.1}
  #allocation0 [shape = 'u32[]', space=smem, size = 0x4, offset = 0x4, fixed_abs, tag = 'smem constant byte address 0x4 - core index']
  #allocation1 [shape = 'u32[144,128]{1,0:T(1,128)}', space=vmem, size = 0x12000, scoped, tag = 'internal scratch']
  %s0 = inlined_call_operand.hbm [shape: f32[2,4,256], index: 0, kind: input, shape index: {}]
  %s1 = inlined_call_operand.vmem [shape: f32[2,4,1], index: 1, kind: output, shape index: {0}]
  %s2 = inlined_call_operand.hbm [shape: f32[2,1,256], index: 2, kind: output, shape index: {1}]
  %3 = xla_tuple %s1, %s2
  %s4 = sld [smem:[#allocation0]]
  $region49: #{tpu_custom_call.1} parent=0
    _
  %s6 = ssub.s32 1, %s4
  %s7 = scalar_select 0, %s6, %s4
  $region1: #{tpu_custom_call.1} parent=0
    #allocation2 [shape = 'u8[8192]{0}', space=vmem, size = 0x2000, scoped, tag = 'input window, operand 0']
    #allocation3 [shape = 's32[2]{0}', space=sflag, size = 0x8, scoped, tag = 'scoped memory for tpu_custom_call.1']
    #allocation4 [shape = 's32[2]{0}', space=sflag, size = 0x8, scoped, tag = 'scoped memory for tpu_custom_call.1']
    #allocation5 [shape = 'u8[2048]{0}', space=vmem, size = 0x800, scoped, tag = 'output window, operand 1']
    %8 = vsyncpa [#allocation3], 0
    %s9 = scalar_lea.sflag [#allocation3], 1
    %10 = vsyncpa %s9, 0
    %11 = vsyncpa [#allocation4], 0
    %s12 = scalar_lea.sflag [#allocation4], 1
    %13 = vsyncpa %s12, 0
    loop: start=0, step=1, limit=4
    $region2: #{tpu_custom_call.1} parent=1 // loop_pre_header
      _
    $region3: #{tpu_custom_call.1} parent=1 // loop_header
      %s15 = sphi 0, %s19
      %p16 = scmp.ge.s32.totalorder %s15, 4
      %s22 = sphi 0, %s34
      %s23 = sphi 0, %s30
      %s24 = sphi 0, %s22
      %s25 = sphi 0, %s23
      %s26 = sphi 0, %s24
      %s27 = sphi 0, %s25
      %s39 = sphi 0, %s41
      %s42 = sphi 0, %s39
      %s43 = sphi 0, %s42
      %s59 = sphi 0, %s43
      %s67 = sphi 0, %s69
      %s70 = sphi 0, %s67
      %s71 = sphi 0, %s70
      %s87 = sphi 0, %s71
      %s93 = sphi 0, %s95
      %s96 = sphi 0, %s93
      %s97 = sphi 0, %s96
      %s113 = sphi 0, %s97
    $region4: #{tpu_custom_call.1} parent=1 // loop_header_branch
      %18 = sbr.rel (%p16) target = $region8
    $region5: #{tpu_custom_call.1} parent=1 // loop_body
      %s20 = ssub.s32 %s15, 1
      %s21 = ssub.s32 %s15, 2
      %s28 = sadd.s32 1, %s23
      %p29 = scmp.ge.s32.totalorder %s28, 1
      %s30 = scalar_select %p29, 0, %s28
      %s31 = sadd.s32 1, %s22
      %s32 = scalar_select %p29, %s31, %s22
      %p33 = scmp.ge.s32.totalorder %s32, 2
      %s34 = scalar_select %p33, 0, %s32
      %s35 = ssub.s32 %s22, %s34
      %s36 = ssub.s32 %s23, %s30
      %s37 = sor.u32 %s35, %s36
      %p38 = scmp.eq.s32.totalorder %s37, 0
      %s40 = sadd.s32 %s39, 1
      %s41 = scalar_select %p38, %s39, %s40
      %p44 = pneg %p38
      %p45 = scmp.eq.s32.totalorder %s15, 1
      %p46 = por %p44, %p45
      %p47 = scmp.ne.s32.totalorder %s39, %s42
      %p48 = scmp.eq.s32.totalorder %s15, 0
      %p49 = por %p47, %p48
      %p50 = scmp.ne.s32.totalorder %s39, %s42
      %p51 = scmp.eq.s32.totalorder %s20, 1
      %p52 = por %p50, %p51
      %p53 = scmp.ne.s32.totalorder %s42, %s43
      %p54 = scmp.eq.s32.totalorder %s20, 0
      %p55 = por %p53, %p54
      %p56 = scmp.ne.s32.totalorder %s42, %s43
      %p57 = scmp.eq.s32.totalorder %s21, 1
      %p58 = por %p56, %p57
      %p60 = scmp.ne.s32.totalorder %s43, %s59
      %p61 = scmp.eq.s32.totalorder %s21, 0
      %p62 = por %p60, %p61
      %s63 = ssub.s32 %s22, %s34
      %s64 = ssub.s32 %s23, %s30
      %s65 = sor.u32 %s63, %s64
      %p66 = scmp.eq.s32.totalorder %s65, 0
      %s68 = sadd.s32 %s67, 1
      %s69 = scalar_select %p66, %s67, %s68
      %p72 = pneg %p66
      %p73 = scmp.eq.s32.totalorder %s15, 1
      %p74 = por %p72, %p73
      %p75 = scmp.ne.s32.totalorder %s67, %s70
      %p76 = scmp.eq.s32.totalorder %s15, 0
      %p77 = por %p75, %p76
      %p78 = scmp.ne.s32.totalorder %s67, %s70
      %p79 = scmp.eq.s32.totalorder %s20, 1
      %p80 = por %p78, %p79
      %p81 = scmp.ne.s32.totalorder %s70, %s71
      %p82 = scmp.eq.s32.totalorder %s20, 0
      %p83 = por %p81, %p82
      %p84 = scmp.ne.s32.totalorder %s70, %s71
      %p85 = scmp.eq.s32.totalorder %s21, 1
      %p86 = por %p84, %p85
      %p88 = scmp.ne.s32.totalorder %s71, %s87
      %p89 = scmp.eq.s32.totalorder %s21, 0
      %p90 = por %p88, %p89
      %s91 = ssub.s32 %s22, %s34
      %p92 = scmp.eq.s32.totalorder %s91, 0
      %s94 = sadd.s32 %s93, 1
      %s95 = scalar_select %p92, %s93, %s94
      %p98 = pneg %p92
      %p99 = scmp.eq.s32.totalorder %s15, 1
      %p100 = por %p98, %p99
      %p101 = scmp.ne.s32.totalorder %s93, %s96
      %p102 = scmp.eq.s32.totalorder %s15, 0
      %p103 = por %p101, %p102
      %p104 = scmp.ne.s32.totalorder %s93, %s96
      %p105 = scmp.eq.s32.totalorder %s20, 1
      %p106 = por %p104, %p105
      %p107 = scmp.ne.s32.totalorder %s96, %s97
      %p108 = scmp.eq.s32.totalorder %s20, 0
      %p109 = por %p107, %p108
      %p110 = scmp.ne.s32.totalorder %s96, %s97
      %p111 = scmp.eq.s32.totalorder %s21, 1
      %p112 = por %p110, %p111
      %p114 = scmp.ne.s32.totalorder %s97, %s113
      %p115 = scmp.eq.s32.totalorder %s21, 0
      %p116 = por %p114, %p115
      %p117 = scmp.le.s32.totalorder 1, %s15
      %p118 = scmp.lt.s32.totalorder %s15, 3
      %p119 = pnand %p117, %p118
      %p120 = pneg %p119
      // Predicated region
      $region9: #{tpu_custom_call.1} parent=5 // pred_check
        _
      $region10: #{tpu_custom_call.1} parent=5 // pred_check_branch
        %122 = sbr.rel (%p119) target = $region12
      $region11: #{tpu_custom_call.1} parent=5 // pred_region
        %s123 = ssub.s32 %s15, 1
      $region12: #{tpu_custom_call.1} parent=5 // pred_fallthru
        _
      %p124 = scmp.lt.s32.totalorder %s15, 2
      // Predicated region
      $region13: #{tpu_custom_call.1} parent=5 // pred_check
        %p125 = pneg %p124
      $region14: #{tpu_custom_call.1} parent=5 // pred_check_branch
        %127 = sbr.rel (%p125) target = $region16
      $region15: #{tpu_custom_call.1} parent=5 // pred_region
        // Predicated region
        $region17: #{tpu_custom_call.1} parent=15 // pred_check
          %p128 = pneg %p49
        $region18: #{tpu_custom_call.1} parent=15 // pred_check_branch
          %130 = sbr.rel (%p128) target = $region20
        $region19: #{tpu_custom_call.1} parent=15 // pred_region
          %s131 = sand.u32 %s39, 1
          %s132 = scalar_lea.sflag [#allocation3], %s131
          %s133 = sand.u32 %s39, 1
          %s134 = smul.addr %s133, 8
          %s135 = scalar_lea.vmem [#allocation2], %s134
          %s137 = ssub.s32 128, 128
          %138 = vsyncadd %s132, %s137
          %s139 = smul.addr %s23, 2
          %s140 = smul.addr %s22, 2
          %s141 = sadd.s32 %s139, %s140
          %s142 = smul.addr %s141, 64
          %s143 = scalar_lea.hbm %s0, %s142
          %s145 = sshll.u32 %s135, 4
          %s146 = int_to_ptr.vmem [resolvable:$true] %s145
          %148 = dma.hbm_to_vmem [thread:$0]  %s143, 128, %s146, %s132
        $region20: #{tpu_custom_call.1} parent=15 // pred_fallthru
          _
      $region16: #{tpu_custom_call.1} parent=5 // pred_fallthru
        _
      %p149 = scmp.le.s32.totalorder 1, %s15
      %p150 = scmp.lt.s32.totalorder %s15, 3
      %p151 = pnand %p149, %p150
      %p152 = pneg %p151
      // Predicated region
      $region21: #{tpu_custom_call.1} parent=5 // pred_check
        _
      $region22: #{tpu_custom_call.1} parent=5 // pred_check_branch
        %154 = sbr.rel (%p151) target = $region24
      $region23: #{tpu_custom_call.1} parent=5 // pred_region
        %s155 = ssub.s32 %s15, 1
        %s156 = sand.u32 %s42, 1
        %s157 = scalar_lea.sflag [#allocation3], %s156
        %s158 = sand.u32 %s42, 1
        %s159 = smul.addr %s158, 8
        %s160 = scalar_lea.vmem [#allocation2], %s159
        // Predicated region
        $region25: #{tpu_custom_call.1} parent=23 // pred_check
          %p161 = pneg %p55
        $region26: #{tpu_custom_call.1} parent=23 // pred_check_branch
          %163 = sbr.rel (%p161) target = $region28
        $region27: #{tpu_custom_call.1} parent=23 // pred_region
          %164 = dma.done %s157, 128
        $region28: #{tpu_custom_call.1} parent=23 // pred_fallthru
          _
        %s165 = sand.u32 %s42, 1
        %s166 = scalar_lea.sflag [#allocation3], %s165
        %s167 = sand.u32 %s42, 1
        %s168 = smul.addr %s167, 8
        %s169 = scalar_lea.vmem [#allocation2], %s168
        %p170 = pneg %p55
        %p171 = pneg %p52
        %p172 = pneg %p83
        %p173 = pneg %p80
        %p174 = scmp.lt.s32.totalorder %s24, 1
        %s175 = scalar_select %p174, %s24, 1
        %p176 = scmp.lt.s32.totalorder %s25, 0
        %s177 = scalar_select %p176, %s25, 0
        %s178 = sadd.s32 %s177, %s175
        %s179 = smul.addr %s178, 4
        %s180 = scalar_lea.vmem %s1, %s179
        %p181 = pneg %p109
        %p182 = pneg %p106
        %s183 = sand.u32 %s96, 1
        %s184 = scalar_lea.sflag [#allocation4], %s183
        %s185 = sand.u32 %s96, 1
        %s186 = smul.addr %s185, 2
        %s187 = scalar_lea.vmem [#allocation5], %s186
        %p188 = scmp.lt.s32.totalorder %s24, 1
        %s189 = scalar_select %p188, %s24, 1
        %p190 = scmp.lt.s32.totalorder %s25, 0
        %s191 = scalar_select %p190, %s25, 0
        %s192 = sadd.s32 %s191, %s189
        %s193 = smul.addr %s192, 4
        %s194 = scalar_lea.vmem %s1, %s193
        %v195 = vld [vmem:[%s160] sm:$0xff]
        %v197 = vcombine.high %v195, %v195
        %vm199 = vcmask 1043456
        %v200 = vsel %vm199, %v195, 0.0
        %v201 = vsel %vm199, %v197, 0.0
        %v202 = vadd.f32 %v200, %v201
        %203 = vadd.xlane.f32.xlu0 %v202
        %v204 = vpop.xlane.xlu0 %203
        %v205 = vmul.f32 %v204, 0.00390625
        %vm206 = vcmask 3072
        %207 = vst.msk [vmem:[%s194] sm:$0xf] %vm206, %v205
        %v208 = vmul.f32 %v205, 0.5
        %209 = vxpose.xlu0.b32.start [1/16] %v208, 128
        %210 = vxpose.xlu0.b32.cont [2/16] 0.0, 128
        %211 = vxpose.xlu0.b32.cont [3/16] 0.0, 128
        %212 = vxpose.xlu0.b32.cont [4/16] 0.0, 128
        %213 = vxpose.xlu0.b32.cont [5/16] 0.0, 128
        %214 = vxpose.xlu0.b32.cont [6/16] 0.0, 128
        %215 = vxpose.xlu0.b32.cont [7/16] 0.0, 128
        %216 = vxpose.xlu0.b32.cont [8/16] 0.0, 128
        %217 = vxpose.xlu0.b32.cont [9/16] 0.0, 128
        %218 = vxpose.xlu0.b32.cont [10/16] 0.0, 128
        %219 = vxpose.xlu0.b32.cont [11/16] 0.0, 128
        %220 = vxpose.xlu0.b32.cont [12/16] 0.0, 128
        %221 = vxpose.xlu0.b32.cont [13/16] 0.0, 128
        %222 = vxpose.xlu0.b32.cont [14/16] 0.0, 128
        %223 = vxpose.xlu0.b32.cont [15/16] 0.0, 128
        %224 = vxpose.xlu0.b32.end [16/16] 0.0, 128
        %v225 = vpop.trf.xlu0
        %v226 = vpop.trf.xlu0
        %v227 = vpop.trf.xlu0
        %v228 = vpop.trf.xlu0
        %v229 = vpop.trf.xlu0
        %v230 = vpop.trf.xlu0
        %v231 = vpop.trf.xlu0
        %v232 = vpop.trf.xlu0
        %v233 = vpop.trf.xlu0
        %v234 = vpop.trf.xlu0
        %v235 = vpop.trf.xlu0
        %v236 = vpop.trf.xlu0
        %v237 = vpop.trf.xlu0
        %v238 = vpop.trf.xlu0
        %v239 = vpop.trf.xlu0
        %v240 = vpop.trf.xlu0
        %vm241 = vcmask 31744
        %v243 = vsel %vm241, %v225, 0
        %v245 = vsel %vm199, %v195, 0
        %v247 = vsel %vm199, %v197, 0
        %249 = vmatprep.subr.mxu0 %v247
        %250 = vmatpush1.msra.mxu0 %v245
        %251 = vmatprep.subr.mxu0 0.0
        %252 = vmatpush1.msra.mxu0 0.0
        %253 = vmatprep.subr.mxu0 0.0
        %254 = vmatpush1.msra.mxu0 0.0
        %255 = vmatprep.subr.mxu0 0.0
        %256 = vmatpush1.msra.mxu0 0.0
        %257 = vmatprep.subr.mxu0 0.0
        %258 = vmatpush1.msra.mxu0 0.0
        %259 = vmatprep.subr.mxu0 0.0
        %260 = vmatpush1.msra.mxu0 0.0
        %261 = vmatprep.subr.mxu0 0.0
        %262 = vmatpush1.msra.mxu0 0.0
        %263 = vmatprep.subr.mxu0 0.0
        %264 = vmatpush1.msra.mxu0 0.0
        %265 = vmatprep.subr.mxu0 0.0
        %266 = vmatpush1.msra.mxu0 0.0
        %267 = vmatprep.subr.mxu0 0.0
        %268 = vmatpush1.msra.mxu0 0.0
        %269 = vmatprep.subr.mxu0 0.0
        %270 = vmatpush1.msra.mxu0 0.0
        %271 = vmatprep.subr.mxu0 0.0
        %272 = vmatpush1.msra.mxu0 0.0
        %273 = vmatprep.subr.mxu0 0.0
        %274 = vmatpush1.msra.mxu0 0.0
        %275 = vmatprep.subr.mxu0 0.0
        %276 = vmatpush1.msra.mxu0 0.0
        %277 = vmatprep.subr.mxu0 0.0
        %278 = vmatpush1.msra.mxu0 0.0
        %279 = vmatprep.subr.mxu0 0.0
        %280 = vmatpush1.msra.mxu0 0.0
        %281 = vmatprep.subr.mxu0 0.0
        %282 = vmatpush1.msra.mxu0 0.0
        %283 = vmatprep.subr.mxu0 0.0
        %284 = vmatpush1.msra.mxu0 0.0
        %285 = vmatprep.subr.mxu0 0.0
        %286 = vmatpush1.msra.mxu0 0.0
        %287 = vmatprep.subr.mxu0 0.0
        %288 = vmatpush1.msra.mxu0 0.0
        %289 = vmatprep.subr.mxu0 0.0
        %290 = vmatpush1.msra.mxu0 0.0
        %291 = vmatprep.subr.mxu0 0.0
        %292 = vmatpush1.msra.mxu0 0.0
        %293 = vmatprep.subr.mxu0 0.0
        %294 = vmatpush1.msra.mxu0 0.0
        %295 = vmatprep.subr.mxu0 0.0
        %296 = vmatpush1.msra.mxu0 0.0
        %297 = vmatprep.subr.mxu0 0.0
        %298 = vmatpush1.msra.mxu0 0.0
        %299 = vmatprep.subr.mxu0 0.0
        %300 = vmatpush1.msra.mxu0 0.0
        %301 = vmatprep.subr.mxu0 0.0
        %302 = vmatpush1.msra.mxu0 0.0
        %303 = vmatprep.subr.mxu0 0.0
        %304 = vmatpush1.msra.mxu0 0.0
        %305 = vmatprep.subr.mxu0 0.0
        %306 = vmatpush1.msra.mxu0 0.0
        %307 = vmatprep.subr.mxu0 0.0
        %308 = vmatpush1.msra.mxu0 0.0
        %309 = vmatprep.subr.mxu0 0.0
        %310 = vmatpush1.msra.mxu0 0.0
        %311 = vmatprep.subr.mxu0 0.0
        %312 = vmatpush1.msra.mxu0 0.0
        %313 = vmatprep.mubr.f32.mxu0 0.0
        %314 = vmatmul.mubr.f32.gmra.mrb[0].mxu0 %v243
        %v315 = vpop.f32.mrb[0].mxu0
        %v316 = vadd.f32 0.0, %v315
        %v317 = vpop.f32.mrb[0].mxu0
        %v318 = vadd.f32 0.0, %v317
        %319 = vdwg.mxu0
        %v322 = vcombine.low %v316, %v318
        %v324 = vunpack.c.l.s4 1966171168
        %v325 = vunpack.c.0.s8 %v324
        %v326 = vlaneseq
        %v327 = vshrl.u32 %v326, 7
        %v328 = vsub.s32 %v325, %v327
        %v329 = vrot.slane %v322, %v328
        %v331 = vunpack.c.l.s4 1966171168
        %v332 = vunpack.c.0.s8 %v331
        %v333 = vlaneseq
        %v334 = vshrl.u32 %v333, 7
        %v335 = vsub.s32 %v332, %v334
        %v336 = vrot.slane %v329, %v335
        %v338 = vlaneseq
        %vm339 = vcmp.ge.s32.totalorder %v338, 0
        %vm340 = vcmp.lt.s32.totalorder %v338, 256
        %vm341 = vmand %vm339, %vm340
        %342 = vst.msk [vmem:[%s187] sm:$0x3] %vm341, %v336
        %p343 = scmp.lt.s32.totalorder %s24, 1
        %s344 = scalar_select %p343, %s24, 1
        %p345 = scmp.lt.s32.totalorder %s25, 0
        %s346 = scalar_select %p345, %s25, 0
        %s347 = sadd.s32 %s346, %s344
        %s348 = smul.addr %s347, 4
        %s349 = scalar_lea.vmem %s1, %s348
        %s350 = sand.u32 %s96, 1
        %s351 = scalar_lea.sflag [#allocation4], %s350
        %s352 = sand.u32 %s96, 1
        %s353 = smul.addr %s352, 2
        %s354 = scalar_lea.vmem [#allocation5], %s353
        // Predicated region
        $region29: #{tpu_custom_call.1} parent=23 // pred_check
          %p355 = pneg %p80
        $region30: #{tpu_custom_call.1} parent=23 // pred_check_branch
          %357 = sbr.rel (%p355) target = $region32
        $region31: #{tpu_custom_call.1} parent=23 // pred_region
          _
        $region32: #{tpu_custom_call.1} parent=23 // pred_fallthru
          _
        // Predicated region
        $region33: #{tpu_custom_call.1} parent=23 // pred_check
          %p358 = pneg %p106
        $region34: #{tpu_custom_call.1} parent=23 // pred_check_branch
          %360 = sbr.rel (%p358) target = $region36
        $region35: #{tpu_custom_call.1} parent=23 // pred_region
          %s362 = ssub.s32 32, 32
          %363 = vsyncadd %s351, %s362
          %s364 = smul.addr %s24, 2
          %s365 = smul.addr %s364, 16
          %s366 = scalar_lea.hbm %s2, %s365
          %s368 = sshll.u32 %s354, 4
          %s369 = int_to_ptr.vmem [resolvable:$true] %s368
          %371 = dma.vmem_to_hbm [thread:$0]  %s369, 32, %s366, %s351
        $region36: #{tpu_custom_call.1} parent=23 // pred_fallthru
          _
      $region24: #{tpu_custom_call.1} parent=5 // pred_fallthru
        _
      %p372 = scmp.le.s32.totalorder 2, %s15
      // Predicated region
      $region37: #{tpu_custom_call.1} parent=5 // pred_check
        %p373 = pneg %p372
      $region38: #{tpu_custom_call.1} parent=5 // pred_check_branch
        %375 = sbr.rel (%p373) target = $region40
      $region39: #{tpu_custom_call.1} parent=5 // pred_region
        %s376 = ssub.s32 %s15, 2
        // Predicated region
        $region41: #{tpu_custom_call.1} parent=39 // pred_check
          %p377 = pneg %p86
        $region42: #{tpu_custom_call.1} parent=39 // pred_check_branch
          %379 = sbr.rel (%p377) target = $region44
        $region43: #{tpu_custom_call.1} parent=39 // pred_region
          %p380 = scmp.lt.s32.totalorder %s26, 1
          %s381 = scalar_select %p380, %s26, 1
          %p382 = scmp.lt.s32.totalorder %s27, 0
          %s383 = scalar_select %p382, %s27, 0
          %s384 = sadd.s32 %s383, %s381
          %s385 = smul.addr %s384, 4
          %s386 = scalar_lea.vmem %s1, %s385
        $region44: #{tpu_custom_call.1} parent=39 // pred_fallthru
          _
        // Predicated region
        $region45: #{tpu_custom_call.1} parent=39 // pred_check
          %p387 = pneg %p112
        $region46: #{tpu_custom_call.1} parent=39 // pred_check_branch
          %389 = sbr.rel (%p387) target = $region48
        $region47: #{tpu_custom_call.1} parent=39 // pred_region
          %s390 = sand.u32 %s97, 1
          %s391 = scalar_lea.sflag [#allocation4], %s390
          %s392 = sand.u32 %s97, 1
          %s393 = smul.addr %s392, 2
          %s394 = scalar_lea.vmem [#allocation5], %s393
          %395 = dma.done %s391, 32
        $region48: #{tpu_custom_call.1} parent=39 // pred_fallthru
          _
      $region40: #{tpu_custom_call.1} parent=5 // pred_fallthru
        _
    $region6: #{tpu_custom_call.1} parent=1 // loop_footer
      %s19 = sadd.s32 1, %s15
    $region7: #{tpu_custom_call.1} parent=1 // loop_footer_branch
      %14 = sbr.rel target = $region3
    $region8: #{tpu_custom_call.1} parent=1 // loop_exit
      _
    %396 = vsyncpa [#allocation3], 1
    %s397 = scalar_lea.sflag [#allocation3], 1
    %398 = vsyncpa %s397, 1
    %399 = vsyncpa [#allocation4], 1
    %s400 = scalar_lea.sflag [#allocation4], 1
    %401 = vsyncpa %s400, 1

</llo_original>
